<compile_context>
chip_gen: v7x
topology: tpu7x:2x2x1
jax: 0.10.0
libtpu: 0.0.40
codegen_flags: <defaults>
</compile_context>

<pallas_src>
import functools

import jax
import jax.numpy as jnp
from jax.experimental import pallas as pl
from jax.experimental.pallas import tpu as pltpu


# Preferred tile sizes (all multiples of 128 -> fine for 4x128 v5e and 2x256 v6e/v7x MXUs).
_TM_PREF = 512
_TN_PREF = 768
_TN_FULL_MAX = 1536   # keep N whole (no N grid axis) for hidden-sized outputs
_TK_PREF = 512
_FFN_TM_PREF = 256    # row tile for the fused FFN kernel (keeps (tm, I) f32 intermediate small)


@functools.lru_cache(maxsize=None)
def _vmem_limit():
    """Per-generation scoped-VMEM budget: ~3/4 of physical, capped at 100 MiB."""
    cap = 128 * 1024 * 1024
    try:
        info = pltpu.get_tpu_info()
        cap = int(getattr(info, "vmem_capacity_bytes", cap))
    except Exception:
        pass
    return min(cap * 3 // 4, 100 * 1024 * 1024)


def _pick_tile(dim, pref, align=128):
    """Largest aligned tile <= pref that divides dim; falls back to the full dim."""
    if dim <= pref:
        return dim
    t = (pref // align) * align
    while t >= align:
        if dim % t == 0:
            return t
        t -= align
    return dim


# ----------------------------- tiled linear (+ optional activation) -----------------------------

def _linear_kernel(x_ref, w_ref, b_ref, o_ref, acc_ref, *, activation, n_k):
    k = pl.program_id(2)

    @pl.when(k == 0)
    def _():
        acc_ref[...] = jnp.zeros_like(acc_ref)

    acc_ref[...] += jnp.dot(x_ref[...], w_ref[...], preferred_element_type=jnp.float32)

    @pl.when(k == n_k - 1)
    def _():
        y = acc_ref[...] + b_ref[...]
        if activation == "relu":
            y = jnp.maximum(y, 0.0)
        elif activation == "gelu":
            # TODO(synk): PyTorch nn.GELU defaults to the exact erf form; tanh approximation
            # is used here (tiny numerical mismatch, guaranteed Mosaic lowering).
            y = jax.nn.gelu(y, approximate=True)
        elif activation == "tanh":
            y = jnp.tanh(y)
        elif activation == "sigmoid":
            y = jax.nn.sigmoid(y)
        o_ref[...] = y.astype(o_ref.dtype)


def linear(x, w, b, activation="none", out_dtype=jnp.bfloat16):
    """y = act(x @ w + b), tiled over (M, N, K) with an f32 VMEM accumulator."""
    M, K = x.shape
    N = w.shape[1]
    tm = _pick_tile(M, _TM_PREF)
    tn = N if N <= _TN_FULL_MAX else _pick_tile(N, _TN_PREF)
    tk = _pick_tile(K, _TK_PREF)
    n_k = K // tk
    return pl.pallas_call(
        functools.partial(_linear_kernel, activation=activation, n_k=n_k),
        out_shape=jax.ShapeDtypeStruct((M, N), out_dtype),
        grid=(M // tm, N // tn, n_k),
        in_specs=[pl.BlockSpec((tm, tk), lambda i, j, k: (i, k)),
                  pl.BlockSpec((tk, tn), lambda i, j, k: (k, j)),
                  pl.BlockSpec((1, tn), lambda i, j, k: (0, j))],
        out_specs=pl.BlockSpec((tm, tn), lambda i, j, k: (i, j)),
        scratch_shapes=[pltpu.VMEM((tm, tn), jnp.float32)],
        compiler_params=pltpu.CompilerParams(
            dimension_semantics=("parallel", "parallel", "arbitrary"),
            vmem_limit_bytes=_vmem_limit()),
    )(x.astype(jnp.bfloat16), w.astype(jnp.bfloat16), b.reshape(1, N).astype(jnp.float32))


# ----------------------------- tiled linear + bias + residual + LayerNorm -----------------------------

def _linear_ln_kernel(x_ref, w_ref, b_ref, r_ref, g_ref, beta_ref, o_ref, acc_ref, *, eps, n_k):
    k = pl.program_id(1)

    @pl.when(k == 0)
    def _():
        acc_ref[...] = jnp.zeros_like(acc_ref)

    acc_ref[...] += jnp.dot(x_ref[...], w_ref[...], preferred_element_type=jnp.float32)

    @pl.when(k == n_k - 1)
    def _():
        y = acc_ref[...] + b_ref[...] + r_ref[...].astype(jnp.float32)
        mu = jnp.mean(y, axis=-1, keepdims=True)
        d = y - mu
        var = jnp.mean(d * d, axis=-1, keepdims=True)          # two-pass variance
        yn = d * jax.lax.rsqrt(var + eps)
        o_ref[...] = (yn * g_ref[...] + beta_ref[...]).astype(o_ref.dtype)


def linear_residual_layernorm(x, w, b, residual, gamma, beta, eps=1e-12, out_dtype=jnp.bfloat16):
    """LayerNorm(residual + x @ w + b): N (=hidden) kept whole so the LN reduction is local."""
    M, K = x.shape
    N = w.shape[1]
    tm, tk = _pick_tile(M, _TM_PREF), _pick_tile(K, _TK_PREF)
    n_k = K // tk
    return pl.pallas_call(
        functools.partial(_linear_ln_kernel, eps=eps, n_k=n_k),
        out_shape=jax.ShapeDtypeStruct((M, N), out_dtype),
        grid=(M // tm, n_k),
        in_specs=[pl.BlockSpec((tm, tk), lambda i, k: (i, k)),
                  pl.BlockSpec((tk, N), lambda i, k: (k, 0)),
                  pl.BlockSpec((1, N), lambda i, k: (0, 0)),
                  pl.BlockSpec((tm, N), lambda i, k: (i, 0)),
                  pl.BlockSpec((1, N), lambda i, k: (0, 0)),
                  pl.BlockSpec((1, N), lambda i, k: (0, 0))],
        out_specs=pl.BlockSpec((tm, N), lambda i, k: (i, 0)),
        scratch_shapes=[pltpu.VMEM((tm, N), jnp.float32)],
        compiler_params=pltpu.CompilerParams(
            dimension_semantics=("parallel", "arbitrary"),
            vmem_limit_bytes=_vmem_limit()),
    )(x.astype(jnp.bfloat16), w.astype(jnp.bfloat16), b.reshape(1, N).astype(jnp.float32),
      residual, gamma.reshape(1, N).astype(jnp.float32), beta.reshape(1, N).astype(jnp.float32))


# ----------------------------- fused FFN block: LN(x + gelu(x@wi+bi)@wo2 + bo2) -----------------------------

def _ffn_kernel(x_ref, wi_ref, bi_ref, wo2_ref, bo2_ref, g_ref, beta_ref, o_ref, *, eps):
    x = x_ref[...]                                               # (tm, H) bf16
    h = jnp.dot(x, wi_ref[...], preferred_element_type=jnp.float32) + bi_ref[...]
    h = jax.nn.gelu(h, approximate=True)                         # (tm, I) f32, stays in VMEM
    y = (jnp.dot(h.astype(x.dtype), wo2_ref[...], preferred_element_type=jnp.float32)
         + bo2_ref[...] + x.astype(jnp.float32))                 # residual = FFN input
    mu = jnp.mean(y, axis=-1, keepdims=True)
    d = y - mu
    var = jnp.mean(d * d, axis=-1, keepdims=True)
    yn = d * jax.lax.rsqrt(var + eps)
    o_ref[...] = (yn * g_ref[...] + beta_ref[...]).astype(o_ref.dtype)


def ffn_block(x, wi, bi, wo2, bo2, gamma, beta, eps=1e-12, out_dtype=jnp.bfloat16):
    """Whole FFN sub-block in one kernel: the (B*S, I) intermediate never hits HBM."""
    M, H = x.shape
    I = wi.shape[1]
    tm = _pick_tile(M, _FFN_TM_PREF)
    return pl.pallas_call(
        functools.partial(_ffn_kernel, eps=eps),
        out_shape=jax.ShapeDtypeStruct((M, H), out_dtype),
        grid=(M // tm,),
        in_specs=[pl.BlockSpec((tm, H), lambda i: (i, 0)),
                  pl.BlockSpec((H, I), lambda i: (0, 0)),     # wi resident in VMEM
                  pl.BlockSpec((1, I), lambda i: (0, 0)),
                  pl.BlockSpec((I, H), lambda i: (0, 0)),     # wo2 resident in VMEM
                  pl.BlockSpec((1, H), lambda i: (0, 0)),
                  pl.BlockSpec((1, H), lambda i: (0, 0)),
                  pl.BlockSpec((1, H), lambda i: (0, 0))],
        out_specs=pl.BlockSpec((tm, H), lambda i: (i, 0)),
        compiler_params=pltpu.CompilerParams(
            dimension_semantics=("parallel",),
            vmem_limit_bytes=_vmem_limit()),
    )(x.astype(jnp.bfloat16), wi.astype(jnp.bfloat16), bi.reshape(1, I).astype(jnp.float32),
      wo2.astype(jnp.bfloat16), bo2.reshape(1, H).astype(jnp.float32),
      gamma.reshape(1, H).astype(jnp.float32), beta.reshape(1, H).astype(jnp.float32))


# ----------------------------- no-residual LayerNorm (embeddings) -----------------------------

def _layernorm_kernel(x_ref, g_ref, b_ref, o_ref, *, eps):
    x = x_ref[...].astype(jnp.float32)
    mu = jnp.mean(x, axis=-1, keepdims=True)
    d = x - mu
    var = jnp.mean(d * d, axis=-1, keepdims=True)
    y = d * jax.lax.rsqrt(var + eps)
    o_ref[...] = (y * g_ref[...] + b_ref[...]).astype(o_ref.dtype)


def layernorm(x, gamma, beta, eps=1e-12, out_dtype=jnp.bfloat16):
    M, H = x.shape
    tm = _pick_tile(M, 2048, align=8)     # mem-bound: large row tiles, fewer grid steps
    return pl.pallas_call(
        functools.partial(_layernorm_kernel, eps=eps),
        out_shape=jax.ShapeDtypeStruct((M, H), out_dtype),
        grid=(M // tm,),
        in_specs=[pl.BlockSpec((tm, H), lambda i: (i, 0)),
                  pl.BlockSpec((1, H), lambda i: (0, 0)),
                  pl.BlockSpec((1, H), lambda i: (0, 0))],
        out_specs=pl.BlockSpec((tm, H), lambda i: (i, 0)),
        compiler_params=pltpu.CompilerParams(
            dimension_semantics=("parallel",),
            vmem_limit_bytes=_vmem_limit()),
    )(x, gamma.reshape(1, H).astype(jnp.float32), beta.reshape(1, H).astype(jnp.float32))


# ----------------------------- attention -----------------------------

def _one_head_attn(q, k, v, mb, scale):
    """q,k,v: (S, Dh) bf16; mb: (1, S) f32 additive key-mask. Returns (S, Dh) f32 context."""
    s = jax.lax.dot_general(q, k, (((1,), (1,)), ((), ())),
                            preferred_element_type=jnp.float32) * scale + mb
    s_max = jnp.max(s, axis=-1, keepdims=True)
    p = jnp.exp(s - s_max)
    inv = pl.reciprocal(jnp.sum(p, axis=-1, keepdims=True), approx=True)
    return jnp.dot(p.astype(v.dtype), v, preferred_element_type=jnp.float32) * inv
    # TODO(synk): for long sequence lengths convert this to a flash-style KV-tiled reduction.


def _attention_split_kernel(q_ref, k_ref, v_ref, mb_ref, o_ref, *, heads, head_dim, scale):
    # q/k/v refs: (1, S, heads*head_dim) bf16 group slabs delivered by BlockSpec DMA.
    mb = mb_ref[0]
    for h in range(heads):
        sl = slice(h * head_dim, (h + 1) * head_dim)
        ctx = _one_head_attn(q_ref[0, :, sl], k_ref[0, :, sl], v_ref[0, :, sl], mb, scale)
        o_ref[0, :, sl] = ctx.astype(o_ref.dtype)    # write immediately: bounded live ranges


def _attention_fused_kernel(qkv_ref, mb_ref, o_ref, *, heads, head_dim, hidden, scale):
    # Fallback for configs where per-head lane slabs cannot be 128-aligned (tiny models).
    mb = mb_ref[0]
    for h in range(heads):
        q = qkv_ref[0, :, h * head_dim:(h + 1) * head_dim]
        k = qkv_ref[0, :, hidden + h * head_dim: hidden + (h + 1) * head_dim]
        v = qkv_ref[0, :, 2 * hidden + h * head_dim: 2 * hidden + (h + 1) * head_dim]
        ctx = _one_head_attn(q, k, v, mb, scale)
        o_ref[0, :, h * head_dim:(h + 1) * head_dim] = ctx.astype(o_ref.dtype)


def attention(qkv, mask_bias, num_heads, head_dim, hidden):
    """qkv: (B, S, 3H) bf16 with [q | k | v] on lanes; returns (B, S, H) merged-head context."""
    B, S, H3 = qkv.shape
    scale = 1.0 / float(head_dim) ** 0.5

    # choose heads-per-group so each q/k/v group slab is 128-lane aligned (head pairs at Dh=64)
    if head_dim % 128 == 0:
        hpg = 1
    elif (128 % head_dim == 0) and (num_heads % (128 // head_dim) == 0):
        hpg = 128 // head_dim
    else:
        hpg = num_heads
    gw = hpg * head_dim
    n_groups = num_heads // hpg

    if gw % 128 == 0:
        # 128-lane-aligned per-group q/k/v blocks; second parallel grid axis feeds both v7x TCs.
        return pl.pallas_call(
            functools.partial(_attention_split_kernel, heads=hpg, head_dim=head_dim, scale=scale),
            grid=(B, n_groups),
            out_shape=jax.ShapeDtypeStruct((B, S, hidden), jnp.bfloat16),
            in_specs=[pl.BlockSpec((1, S, gw), lambda b, g: (b, 0, g)),
                      pl.BlockSpec((1, S, gw), lambda b, g: (b, 0, n_groups + g)),
                      pl.BlockSpec((1, S, gw), lambda b, g: (b, 0, 2 * n_groups + g)),
                      pl.BlockSpec((1, 1, S), lambda b, g: (b, 0, 0))],
            out_specs=pl.BlockSpec((1, S, gw), lambda b, g: (b, 0, g)),
            compiler_params=pltpu.CompilerParams(
                dimension_semantics=("parallel", "parallel"),
                vmem_limit_bytes=_vmem_limit()),
        )(qkv, qkv, qkv, mask_bias)

    # fallback: one batch element per grid step, full (1, S, 3H) block, static head unroll
    return pl.pallas_call(
        functools.partial(_attention_fused_kernel, heads=num_heads, head_dim=head_dim,
                          hidden=hidden, scale=scale),
        grid=(B,),
        out_shape=jax.ShapeDtypeStruct((B, S, hidden), jnp.bfloat16),
        in_specs=[pl.BlockSpec((1, S, H3), lambda b: (b, 0, 0)),
                  pl.BlockSpec((1, 1, S), lambda b: (b, 0, 0))],
        out_specs=pl.BlockSpec((1, S, hidden), lambda b: (b, 0, 0)),
        compiler_params=pltpu.CompilerParams(
            dimension_semantics=("parallel",),
            vmem_limit_bytes=_vmem_limit()),
    )(qkv, mask_bias)


# ----------------------------- fused pooler + MLP head + sigmoid -----------------------------

def _head_kernel(cls_ref, wp_ref, bp_ref, w1_ref, b1_ref, w2_ref, b2_ref, o_ref):
    x = cls_ref[...].astype(jnp.float32)
    pooled = jnp.tanh(jnp.dot(x, wp_ref[...], preferred_element_type=jnp.float32) + bp_ref[...])
    h = jnp.maximum(jnp.dot(pooled, w1_ref[...], preferred_element_type=jnp.float32) + b1_ref[...], 0.0)
    logit = jnp.dot(h, w2_ref[...], preferred_element_type=jnp.float32) + b2_ref[...]
    o_ref[...] = jax.nn.sigmoid(logit).astype(o_ref.dtype)


def classifier_head(cls, wp, bp, w1, b1, w2, b2):
    B, H = cls.shape
    vmem = pl.BlockSpec(memory_space=pltpu.MemorySpace.VMEM)
    return pl.pallas_call(
        _head_kernel,
        out_shape=jax.ShapeDtypeStruct((B, 1), jnp.float32),
        in_specs=[vmem] * 7,
        out_specs=vmem,
    )(cls, wp, bp.reshape(1, H), w1, b1.reshape(1, H), w2, b2.reshape(1, 1))


# ----------------------------- parameters -----------------------------

def init_params(key, cfg):
    H, I = cfg["hidden"], cfg["intermediate"]

    def nrm(k, shape, dtype=jnp.float32):
        return (jax.random.normal(k, shape, jnp.float32) * 0.02).astype(dtype)

    keys = iter(jax.random.split(key, 16 + 8 * cfg["layers"]))
    params = {
        "word_emb": nrm(next(keys), (cfg["vocab"], H)),
        "pos_emb": nrm(next(keys), (cfg["max_pos"], H)),
        "type_emb": nrm(next(keys), (2, H)),
        "emb_ln_g": jnp.ones((H,), jnp.float32),
        "emb_ln_b": jnp.zeros((H,), jnp.float32),
        "layers": [],
        # pooler + classifier head weights (tiny; kept f32, used by one fused kernel)
        "wp": nrm(next(keys), (H, H)), "bp": jnp.zeros((H,), jnp.float32),
        "w1": nrm(next(keys), (H, H)), "b1": jnp.zeros((H,), jnp.float32),
        "w2": nrm(next(keys), (H, 1)), "b2": jnp.zeros((1,), jnp.float32),
    }
    for _ in range(cfg["layers"]):
        wq, wk, wv = (nrm(next(keys), (H, H)) for _ in range(3))
        params["layers"].append({
            # fused QKV projection weight, stored bf16 for the MXU
            "wqkv": jnp.concatenate([wq, wk, wv], axis=1).astype(jnp.bfloat16),
            "bqkv": jnp.zeros((3 * H,), jnp.float32),
            "wo": nrm(next(keys), (H, H), jnp.bfloat16), "bo": jnp.zeros((H,), jnp.float32),
            "ln1_g": jnp.ones((H,), jnp.float32), "ln1_b": jnp.zeros((H,), jnp.float32),
            "wi": nrm(next(keys), (H, I), jnp.bfloat16), "bi": jnp.zeros((I,), jnp.float32),
            "wo2": nrm(next(keys), (I, H), jnp.bfloat16), "bo2": jnp.zeros((H,), jnp.float32),
            "ln2_g": jnp.ones((H,), jnp.float32), "ln2_b": jnp.zeros((H,), jnp.float32),
        })
    return params


# ----------------------------- model forward -----------------------------

def bert_binary_classifier(params, input_ids, attn_mask, cfg):
    B, S = input_ids.shape
    H, nH = cfg["hidden"], cfg["heads"]
    Dh = H // nH

    # --- embeddings (gather is plain-JAX glue), then no-residual LayerNorm kernel ---
    # TODO(synk): token_type_ids are fixed to segment 0 (the reference forward never passes them).
    x = (jnp.take(params["word_emb"], input_ids, axis=0)
         + params["pos_emb"][None, :S, :]
         + params["type_emb"][0][None, None, :]).reshape(B * S, H)
    x = layernorm(x, params["emb_ln_g"], params["emb_ln_b"])        # (B*S, H) bf16

    # additive key-mask bias, computed once (tiny)
    mask_bias = ((1.0 - attn_mask.astype(jnp.float32)) * -1e9).reshape(B, 1, S)

    # --- transformer encoder layers ---
    for lyr in params["layers"]:
        qkv = linear(x, lyr["wqkv"], lyr["bqkv"])                   # fused Q|K|V: (B*S, 3H)
        ctx = attention(qkv.reshape(B, S, 3 * H), mask_bias, nH, Dh, H)   # (B, S, H), heads merged
        x = linear_residual_layernorm(ctx.reshape(B * S, H), lyr["wo"], lyr["bo"],
                                      x, lyr["ln1_g"], lyr["ln1_b"])
        x = ffn_block(x, lyr["wi"], lyr["bi"], lyr["wo2"], lyr["bo2"],
                      lyr["ln2_g"], lyr["ln2_b"])                   # fused FFN + residual + LN

    # --- pooler (tanh on [CLS]) + MLP head + sigmoid, one fused kernel ---
    cls = x.reshape(B, S, H)[:, 0, :]
    return classifier_head(cls, params["wp"], params["bp"],
                           params["w1"], params["b1"], params["w2"], params["b2"])  # (B, 1)


# ----------------------------- main -----------------------------

if __name__ == "__main__":
    cfg = dict(vocab=100, max_pos=16, hidden=32, heads=2, layers=2, intermediate=64)
    B, S = 2, 8

    key = jax.random.PRNGKey(0)
    k_param, k_ids = jax.random.split(key)
    params = init_params(k_param, cfg)

    input_ids = jax.random.randint(k_ids, (B, S), 0, cfg["vocab"], dtype=jnp.int32)
    attn_mask = jnp.ones((B, S), jnp.int32).at[1, 6:].set(0)  # second sequence padded

    out = bert_binary_classifier(params, input_ids, attn_mask, cfg)
    out = jax.block_until_ready(out)

    assert out.shape == (B, 1), out.shape
    assert bool(jnp.all(jnp.isfinite(out)))
    assert bool(jnp.all((out > 0.0) & (out < 1.0)))
    print("KERNEL_OK")
</pallas_src>

<mosaic_0001>
module attributes {stable_mosaic.version = 11 : i64} {
  func.func @_layernorm_kernel(%arg0: i32, %arg1: memref<16x32xf32, #tpu.memory_space<vmem>>, %arg2: memref<1x32xf32, #tpu.memory_space<vmem>>, %arg3: memref<1x32xf32, #tpu.memory_space<vmem>>, %arg4: memref<16x32xbf16, #tpu.memory_space<vmem>>) attributes {dimension_semantics = [#tpu.dimension_semantics<parallel>], iteration_bounds = array<i64: 1>, scalar_prefetch = 0 : i64, scratch_operands = 0 : i64, tpu.core_type = #tpu.core_type<tc>, window_params = [{transform_indices = @transform_0, window_bounds = array<i64: 16, 32>}, {pipeline_mode = #tpu.pipeline_mode<synchronous>, transform_indices = @transform_1, window_bounds = array<i64: 1, 32>}, {pipeline_mode = #tpu.pipeline_mode<synchronous>, transform_indices = @transform_2, window_bounds = array<i64: 1, 32>}, {transform_indices = @transform_3, window_bounds = array<i64: 16, 32>}]} {
    %c0 = arith.constant 0 : index
    %c0_0 = arith.constant 0 : index
    %0 = vector.load %arg1[%c0, %c0_0] : memref<16x32xf32, #tpu.memory_space<vmem>>, vector<16x32xf32>
    %cst = arith.constant dense<0.000000e+00> : vector<16xf32>
    %1 = vector.multi_reduction <add>, %0, %cst [1] : vector<16x32xf32> to vector<16xf32>
    %2 = vector.shape_cast %1 : vector<16xf32> to vector<16x1xf32>
    %cst_1 = arith.constant 3.200000e+01 : f32
    %3 = vector.broadcast %cst_1 : f32 to vector<16x1xf32>
    %4 = arith.divf %2, %3 : vector<16x1xf32>
    %5 = vector.broadcast %4 : vector<16x1xf32> to vector<16x32xf32>
    %6 = arith.subf %0, %5 : vector<16x32xf32>
    %7 = arith.mulf %6, %6 : vector<16x32xf32>
    %cst_2 = arith.constant dense<0.000000e+00> : vector<16xf32>
    %8 = vector.multi_reduction <add>, %7, %cst_2 [1] : vector<16x32xf32> to vector<16xf32>
    %9 = vector.shape_cast %8 : vector<16xf32> to vector<16x1xf32>
    %cst_3 = arith.constant 3.200000e+01 : f32
    %10 = vector.broadcast %cst_3 : f32 to vector<16x1xf32>
    %11 = arith.divf %9, %10 : vector<16x1xf32>
    %cst_4 = arith.constant 9.99999996E-13 : f32
    %12 = vector.broadcast %cst_4 : f32 to vector<16x1xf32>
    %13 = arith.addf %11, %12 : vector<16x1xf32>
    %14 = math.rsqrt %13 : vector<16x1xf32>
    %15 = vector.broadcast %14 : vector<16x1xf32> to vector<16x32xf32>
    %16 = arith.mulf %6, %15 : vector<16x32xf32>
    %c0_5 = arith.constant 0 : index
    %c0_6 = arith.constant 0 : index
    %17 = vector.load %arg2[%c0_5, %c0_6] : memref<1x32xf32, #tpu.memory_space<vmem>>, vector<1x32xf32>
    %18 = vector.broadcast %17 : vector<1x32xf32> to vector<16x32xf32>
    %19 = arith.mulf %16, %18 : vector<16x32xf32>
    %c0_7 = arith.constant 0 : index
    %c0_8 = arith.constant 0 : index
    %20 = vector.load %arg3[%c0_7, %c0_8] : memref<1x32xf32, #tpu.memory_space<vmem>>, vector<1x32xf32>
    %21 = vector.broadcast %20 : vector<1x32xf32> to vector<16x32xf32>
    %22 = arith.addf %19, %21 : vector<16x32xf32>
    %23 = arith.truncf %22 : vector<16x32xf32> to vector<16x32xbf16>
    %c0_9 = arith.constant 0 : index
    %c0_10 = arith.constant 0 : index
    %24 = vector.load %arg4[%c0_9, %c0_10] : memref<16x32xbf16, #tpu.memory_space<vmem>>, vector<16x32xbf16>
    tpu.vector_store %arg4[%c0_9, %c0_10], %23 {strides = array<i32>} : memref<16x32xbf16, #tpu.memory_space<vmem>>, vector<16x32xbf16>,
    return
  }
  func.func @transform_0(%arg0: i32) -> (i32, i32) {
    %c0_i32 = arith.constant 0 : i32
    %c0_i32_0 = arith.constant 0 : i32
    return %arg0, %c0_i32 : i32, i32
  }
  func.func @transform_1(%arg0: i32) -> (i32, i32) {
    %c0_i32 = arith.constant 0 : i32
    %c0_i32_0 = arith.constant 0 : i32
    %c0_i32_1 = arith.constant 0 : i32
    return %c0_i32, %c0_i32_0 : i32, i32
  }
  func.func @transform_2(%arg0: i32) -> (i32, i32) {
    %c0_i32 = arith.constant 0 : i32
    %c0_i32_0 = arith.constant 0 : i32
    %c0_i32_1 = arith.constant 0 : i32
    return %c0_i32, %c0_i32_0 : i32, i32
  }
  func.func @transform_3(%arg0: i32) -> (i32, i32) {
    %c0_i32 = arith.constant 0 : i32
    %c0_i32_0 = arith.constant 0 : i32
    return %arg0, %c0_i32 : i32, i32
  }
}

</mosaic_0001>

<llo_original>
// kernel: tpu_custom_call.1
$region0: #{tpu_custom_call.1}
  #allocation0 [shape = 'u32[]', space=smem, size = 0x4, offset = 0x4, fixed_abs, tag = 'smem constant byte address 0x4 - core index']
  #allocation1 [shape = 'u32[144,128]{1,0:T(1,128)}', space=vmem, size = 0x12000, scoped, tag = 'internal scratch']
  %s0 = inlined_call_operand.hbm [shape: f32[16,32], index: 0, kind: input, shape index: {}]
  %s1 = inlined_call_operand.hbm [shape: f32[1,32], index: 1, kind: input, shape index: {}]
  %s2 = inlined_call_operand.hbm [shape: f32[1,32], index: 2, kind: input, shape index: {}]
  %s3 = inlined_call_operand.hbm [shape: bf16[16,32], index: 3, kind: output, shape index: {}]
  %s4 = sld [smem:[#allocation0]]
  $region34: #{tpu_custom_call.1} parent=0
    _
  %s6 = ssub.s32 1, %s4
  %s7 = scalar_select 0, %s6, %s4
  $region1: #{tpu_custom_call.1} parent=0
    #allocation2 [shape = 'u8[8192]{0}', space=vmem, size = 0x2000, scoped, tag = 'input window, operand 0, single buffered']
    #allocation3 [shape = 's32[1]{0}', space=sflag, size = 0x4, scoped, tag = 'scoped memory for tpu_custom_call.1']
    #allocation4 [shape = 's32[1]{0}', space=sflag, size = 0x4, scoped, tag = 'scoped memory for tpu_custom_call.1']
    #allocation5 [shape = 'u8[512]{0}', space=vmem, size = 0x400, scoped, tag = 'input window, operand 1, single buffered']
    #allocation6 [shape = 's32[1]{0}', space=sflag, size = 0x4, scoped, tag = 'scoped memory for tpu_custom_call.1']
    #allocation7 [shape = 'u8[512]{0}', space=vmem, size = 0x400, scoped, tag = 'input window, operand 2, single buffered']
    #allocation8 [shape = 'u8[4096]{0}', space=vmem, size = 0x1000, scoped, tag = 'output window, operand 0, single buffered']
    %8 = vsyncpa [#allocation3], 0
    %9 = vsyncpa [#allocation6], 0
    %10 = vsyncpa [#allocation4], 0
    // Predicated region
    $region2: #{tpu_custom_call.1} parent=1 // pred_check
      _
    $region3: #{tpu_custom_call.1} parent=1 // pred_check_branch
      %12 = sbr.rel (0) target = $region5
    $region4: #{tpu_custom_call.1} parent=1 // pred_region
      %s14 = ssub.s32 256, 256
      %15 = vsyncadd [#allocation3], %s14
      %s16 = sshll.u32 [#allocation2], 4
      %s17 = int_to_ptr.vmem [resolvable:$true] %s16
      %22 = dma.hbm_to_vmem [thread:$0]  %s0, 256, %s17, [#allocation3], 128, 128, 8
    $region5: #{tpu_custom_call.1} parent=1 // pred_fallthru
      _
    // Predicated region
    $region6: #{tpu_custom_call.1} parent=1 // pred_check
      _
    $region7: #{tpu_custom_call.1} parent=1 // pred_check_branch
      %24 = sbr.rel (0) target = $region9
    $region8: #{tpu_custom_call.1} parent=1 // pred_region
      %s26 = ssub.s32 16, 16
      %27 = vsyncadd [#allocation6], %s26
      %s29 = sshll.u32 [#allocation5], 4
      %s30 = int_to_ptr.vmem [resolvable:$true] %s29
      %32 = dma.hbm_to_vmem [thread:$0]  %s1, 16, %s30, [#allocation6]
    $region9: #{tpu_custom_call.1} parent=1 // pred_fallthru
      _
    // Predicated region
    $region10: #{tpu_custom_call.1} parent=1 // pred_check
      _
    $region11: #{tpu_custom_call.1} parent=1 // pred_check_branch
      %34 = sbr.rel (0) target = $region13
    $region12: #{tpu_custom_call.1} parent=1 // pred_region
      %s36 = ssub.s32 16, 16
      %37 = vsyncadd [#allocation6], %s36
      %s39 = sshll.u32 [#allocation7], 4
      %s40 = int_to_ptr.vmem [resolvable:$true] %s39
      %42 = dma.hbm_to_vmem [thread:$0]  %s2, 16, %s40, [#allocation6]
    $region13: #{tpu_custom_call.1} parent=1 // pred_fallthru
      _
    // Predicated region
    $region14: #{tpu_custom_call.1} parent=1 // pred_check
      _
    $region15: #{tpu_custom_call.1} parent=1 // pred_check_branch
      %44 = sbr.rel (0) target = $region17
    $region16: #{tpu_custom_call.1} parent=1 // pred_region
      %45 = dma.done [#allocation3], 256
    $region17: #{tpu_custom_call.1} parent=1 // pred_fallthru
      _
    // Predicated region
    $region18: #{tpu_custom_call.1} parent=1 // pred_check
      _
    $region19: #{tpu_custom_call.1} parent=1 // pred_check_branch
      %47 = sbr.rel (0) target = $region21
    $region20: #{tpu_custom_call.1} parent=1 // pred_region
      %48 = dma.done [#allocation6], 16
    $region21: #{tpu_custom_call.1} parent=1 // pred_fallthru
      _
    // Predicated region
    $region22: #{tpu_custom_call.1} parent=1 // pred_check
      _
    $region23: #{tpu_custom_call.1} parent=1 // pred_check_branch
      %50 = sbr.rel (0) target = $region25
    $region24: #{tpu_custom_call.1} parent=1 // pred_region
      %51 = dma.done [#allocation6], 16
    $region25: #{tpu_custom_call.1} parent=1 // pred_fallthru
      _
    %v52 = vld [vmem:[#allocation2] sm:$0xff]
    %v53 = vld [vmem:[#allocation2 + $0x8] sm:$0xff]
    %vm54 = vcmask 261120
    %v55 = vsel %vm54, %v52, 0.0
    %56 = vadd.xlane.f32.xlu0 %v55
    %v57 = vpop.xlane.xlu0 %56
    %v58 = vsel %vm54, %v53, 0.0
    %59 = vadd.xlane.f32.xlu0 %v58
    %v60 = vpop.xlane.xlu0 %59
    %v61 = vrcp.pop 32.0
    %v62 = vmul.f32 %v57, %v61
    %v63 = vmul.f32 %v60, %v61
    %v64 = vsub.f32 %v52, %v62
    %v65 = vsub.f32 %v53, %v63
    %v66 = vmul.f32 %v64, %v64
    %v67 = vmul.f32 %v65, %v65
    %v68 = vsel %vm54, %v66, 0.0
    %69 = vadd.xlane.f32.xlu0 %v68
    %v70 = vpop.xlane.xlu0 %69
    %v71 = vsel %vm54, %v67, 0.0
    %72 = vadd.xlane.f32.xlu0 %v71
    %v73 = vpop.xlane.xlu0 %72
    %v74 = vmul.f32 %v70, %v61
    %v75 = vmul.f32 %v73, %v61
    %v76 = vadd.f32 %v74, 1e-12
    %v77 = vadd.f32 %v75, 1e-12
    %v78 = vrsqrt.pop %v76
    %v79 = vrsqrt.pop %v77
    %v80 = vmul.f32 %v64, %v78
    %v81 = vmul.f32 %v65, %v79
    %v82 = vld [vmem:[#allocation5] sm:$0x1]
    %v84 = vlaneseq
    %v85 = vshrl.u32 %v84, 7
    %v86 = vsub.s32 0, %v85
    %v87 = vrot.slane %v82, %v86
    %v89 = vmul.f32 %v80, %v87
    %v90 = vmul.f32 %v81, %v87
    %v91 = vld [vmem:[#allocation7] sm:$0x1]
    %v93 = vlaneseq
    %v94 = vshrl.u32 %v93, 7
    %v95 = vsub.s32 0, %v94
    %v96 = vrot.slane %v91, %v95
    %v98 = vadd.f32 %v89, %v96
    %v99 = vadd.f32 %v90, %v96
    %v100 = vpack.c.bf16 %v99, %v98
    %v102 = vunpack.c.l.b16 %v100
    %v103 = vunpack.c.h.b16 %v100
    %v104 = vpack.c.b16 %v102, %v102
    %v105 = vpack.c.b16 %v103, %v103
    %vm108 = vcmask 257024
    %109 = vst.msk [vmem:[#allocation8] sm:$0xf] %vm108, %v104
    %110 = vst.msk [vmem:[#allocation8 + $0x4] sm:$0xf] %vm108, %v105
    // Predicated region
    $region26: #{tpu_custom_call.1} parent=1 // pred_check
      _
    $region27: #{tpu_custom_call.1} parent=1 // pred_check_branch
      %112 = sbr.rel (0) target = $region29
    $region28: #{tpu_custom_call.1} parent=1 // pred_region
      %s114 = ssub.s32 128, 128
      %115 = vsyncadd [#allocation4], %s114
      %s116 = sshll.u32 [#allocation8], 4
      %s117 = int_to_ptr.vmem [resolvable:$true] %s116
      %122 = dma.vmem_to_hbm [thread:$0]  %s117, 128, %s3, [#allocation4], 64, 64, 4
    $region29: #{tpu_custom_call.1} parent=1 // pred_fallthru
      _
    // Predicated region
    $region30: #{tpu_custom_call.1} parent=1 // pred_check
      _
    $region31: #{tpu_custom_call.1} parent=1 // pred_check_branch
      %124 = sbr.rel (0) target = $region33
    $region32: #{tpu_custom_call.1} parent=1 // pred_region
      %125 = dma.done [#allocation4], 128
    $region33: #{tpu_custom_call.1} parent=1 // pred_fallthru
      _
    %126 = vsyncpa [#allocation3], 1
    %127 = vsyncpa [#allocation6], 1
    %128 = vsyncpa [#allocation4], 1

</llo_original>
